<compile_context>
chip_gen: v5e
topology: v5e:2x2
jax: 0.10.0
libtpu: 0.0.40
codegen_flags: <defaults>
</compile_context>

<pallas_src>
import jax
import jax.numpy as jnp
from jax.experimental import pallas as pl
from jax.experimental.pallas import tpu as pltpu

IN_DIM = 1
HIDDEN_DIM = 1
OUT_DIM = 1

LANES = 128                    # vreg lane width
DEFAULT_BLOCK_ROWS = 4096      # 4096 x 128 f32 tile = 2 MiB
SMALL_B_THRESHOLD = 64 * 1024  # below this, plain XLA fusion is faster


def _round_up(n, m):
    return ((n + m - 1) // m) * m


def _cdiv(a, b):
    return -(-a // b)


def _model_kernel(params_ref, x_ref, o_ref):
    # params layout (SMEM, f32[4]): [na, nb, c, d] where the scalar affine
    # chain has been folded in the wrapper:
    #   sigmoid(i2h(x) + h2o(s2h(x))) = sigmoid(a*x + b) = 1/(1 + exp(na*x + nb))
    #   h2o(s2o(x))                   = c*x + d
    na = params_ref[0]
    nb = params_ref[1]
    c = params_ref[2]
    d = params_ref[3]

    x = x_ref[...]                                       # (tile_rows, 128) f32
    # exp -> EUP slot, approx reciprocal -> EUP slot (no Newton refine on VALU)
    sig = pl.reciprocal(1.0 + jnp.exp(x * na + nb), approx=True)
    o_ref[...] = sig + (x * c + d)


def model_forward(x, params, *, block_rows=DEFAULT_BLOCK_ROWS,
                  small_b_threshold=SMALL_B_THRESHOLD):
    """x: (B, 1) float32, params: (8,) float32 raw Linear weights/biases:
       [w_i2h, b_i2h, w_h2o, b_h2o, w_s2h, b_s2h, w_s2o, b_s2o]."""
    B, in_dim = x.shape
    assert in_dim == IN_DIM

    w_i2h, b_i2h, w_h2o, b_h2o, w_s2h, b_s2h, w_s2o, b_s2o = (
        params[i] for i in range(8))
    a = w_i2h + w_s2h * w_h2o
    b = b_i2h + b_s2h * w_h2o + b_h2o
    c = w_s2o * w_h2o
    d = b_s2o * w_h2o + b_h2o

    if B < small_b_threshold:
        # XLA-fused fallback: for small B the pad/launch/slice overhead dwarfs
        # two FMAs + one sigmoid per element.
        xf = x.reshape(-1)
        return (jax.nn.sigmoid(xf * a + b) + (xf * c + d)).reshape(B, OUT_DIM)

    folded = jnp.stack([-a, -b, c, d]).astype(jnp.float32)

    # Lane-dense slab: (rows, 128).  When B % 128 == 0 the reshapes are free
    # bitcasts (no pad, no slice).  Otherwise pad only up to the next 128.
    xf = x.reshape(-1)
    rows = _cdiv(B, LANES)
    padded = rows * LANES
    if padded != B:
        xf = jnp.pad(xf, (0, padded - B))   # one extra HBM pass; unaligned B only
    slab = xf.reshape(rows, LANES)

    # Row tiling: big tiles (amortize per-step overhead), multiple of 8 rows,
    # and keep >= 2 grid tiles whenever possible so v7x can use both TCs.
    block_rows = max(8, _round_up(block_rows, 8))
    if rows < 16:
        tile_rows = rows                     # block == full array dims (always legal)
    else:
        tile_rows = min(block_rows, _round_up(_cdiv(rows, 2), 8))
    grid = (_cdiv(rows, tile_rows),)         # partial last block masked by Pallas

    out_slab = pl.pallas_call(
        _model_kernel,
        out_shape=jax.ShapeDtypeStruct((rows, LANES), x.dtype),
        grid_spec=pltpu.PrefetchScalarGridSpec(
            num_scalar_prefetch=1,           # folded params -> SMEM
            grid=grid,
            in_specs=[
                pl.BlockSpec((tile_rows, LANES), lambda i, p: (i, 0)),
            ],
            out_specs=pl.BlockSpec((tile_rows, LANES), lambda i, p: (i, 0)),
        ),
        compiler_params=pltpu.CompilerParams(
            dimension_semantics=("parallel",),
        ),
    )(folded, slab)

    out_flat = out_slab.reshape(-1)
    if padded != B:
        out_flat = out_flat[:B]
    return out_flat.reshape(B, OUT_DIM)


def reference_forward(x, params):
    """Literal per-layer graph, matching the PyTorch module's first call."""
    w_i2h, b_i2h, w_h2o, b_h2o, w_s2h, b_s2h, w_s2o, b_s2o = (
        params[i] for i in range(8))
    i2h_x = x * w_i2h + b_i2h
    s2h_x = x * w_s2h + b_s2h
    h_sig = jax.nn.sigmoid(i2h_x + (s2h_x * w_h2o + b_h2o))
    s2o_x = x * w_s2o + b_s2o
    return h_sig + (s2o_x * w_h2o + b_h2o)


if __name__ == "__main__":
    key = jax.random.PRNGKey(0)
    k_p, k1, k2, k3 = jax.random.split(key, 4)

    # Deterministic parameter init, mimicking torch.nn.Linear's
    # U(-1/sqrt(fan_in), 1/sqrt(fan_in)) with fan_in = 1 -> bound = 1.
    params = jax.random.uniform(k_p, (8,), dtype=jnp.float32,
                                minval=-1.0, maxval=1.0)

    # 1) Tiny batch forced through the Pallas path (unaligned -> minimal pad,
    #    single (1, 128) block equal to the array dims).
    x1 = jax.random.normal(k1, (8, IN_DIM), dtype=jnp.float32)
    o1 = jax.block_until_ready(model_forward(x1, params, small_b_threshold=0))
    assert o1.shape == (8, OUT_DIM)
    assert jnp.allclose(o1, reference_forward(x1, params), atol=2e-3, rtol=2e-3)

    # 2) Unaligned batch, multi-tile "parallel" grid (block_rows=8 -> 2 tiles).
    x2 = jax.random.normal(k2, (2000, IN_DIM), dtype=jnp.float32)
    o2 = jax.block_until_ready(
        model_forward(x2, params, block_rows=8, small_b_threshold=0))
    assert o2.shape == (2000, OUT_DIM)
    assert jnp.allclose(o2, reference_forward(x2, params), atol=2e-3, rtol=2e-3)

    # 3) 128-aligned batch: zero-copy path (no pad, no slice), 2-tile grid.
    x3 = jax.random.normal(k3, (4096, IN_DIM), dtype=jnp.float32)
    o3 = jax.block_until_ready(model_forward(x3, params, small_b_threshold=0))
    assert o3.shape == (4096, OUT_DIM)
    assert jnp.allclose(o3, reference_forward(x3, params), atol=2e-3, rtol=2e-3)

    # 4) Default small-batch fallback (no pallas_call): tight tolerance.
    o4 = jax.block_until_ready(model_forward(x1, params))
    assert o4.shape == (8, OUT_DIM)
    assert jnp.allclose(o4, reference_forward(x1, params), atol=1e-5, rtol=1e-5)

    print("KERNEL_OK")
</pallas_src>

<mosaic_0001>
module attributes {stable_mosaic.version = 11 : i64} {
  func.func @_model_kernel(%arg0: i32, %arg1: memref<4xf32, #tpu.memory_space<smem>>, %arg2: memref<1x128xf32, #tpu.memory_space<vmem>>, %arg3: memref<1x128xf32, #tpu.memory_space<vmem>>) attributes {dimension_semantics = [#tpu.dimension_semantics<parallel>], iteration_bounds = array<i64: 1>, scalar_prefetch = 1 : i64, scratch_operands = 0 : i64, tpu.core_type = #tpu.core_type<tc>, window_params = [{transform_indices = @transform_0, window_bounds = array<i64: 1, 128>}, {transform_indices = @transform_1, window_bounds = array<i64: 1, 128>}]} {
    %c0 = arith.constant 0 : index
    %0 = memref.load %arg1[%c0] : memref<4xf32, #tpu.memory_space<smem>>
    %c1 = arith.constant 1 : index
    %1 = memref.load %arg1[%c1] : memref<4xf32, #tpu.memory_space<smem>>
    %c2 = arith.constant 2 : index
    %2 = memref.load %arg1[%c2] : memref<4xf32, #tpu.memory_space<smem>>
    %c3 = arith.constant 3 : index
    %3 = memref.load %arg1[%c3] : memref<4xf32, #tpu.memory_space<smem>>
    %c0_0 = arith.constant 0 : index
    %c0_1 = arith.constant 0 : index
    %4 = vector.load %arg2[%c0_0, %c0_1] : memref<1x128xf32, #tpu.memory_space<vmem>>, vector<1x128xf32>
    %5 = vector.broadcast %0 : f32 to vector<1x128xf32>
    %6 = arith.mulf %4, %5 : vector<1x128xf32>
    %7 = vector.broadcast %1 : f32 to vector<1x128xf32>
    %8 = arith.addf %6, %7 : vector<1x128xf32>
    %9 = math.exp %8 : vector<1x128xf32>
    %cst = arith.constant 1.000000e+00 : f32
    %10 = vector.broadcast %cst : f32 to vector<1x128xf32>
    %11 = arith.addf %10, %9 : vector<1x128xf32>
    %12 = tpu.reciprocal %11 {approx = true} : vector<1x128xf32> -> vector<1x128xf32>
    %13 = vector.broadcast %2 : f32 to vector<1x128xf32>
    %14 = arith.mulf %4, %13 : vector<1x128xf32>
    %15 = vector.broadcast %3 : f32 to vector<1x128xf32>
    %16 = arith.addf %14, %15 : vector<1x128xf32>
    %17 = arith.addf %12, %16 : vector<1x128xf32>
    %c0_2 = arith.constant 0 : index
    %c0_3 = arith.constant 0 : index
    %18 = vector.load %arg3[%c0_2, %c0_3] : memref<1x128xf32, #tpu.memory_space<vmem>>, vector<1x128xf32>
    tpu.vector_store %arg3[%c0_2, %c0_3], %17 {strides = array<i32>} : memref<1x128xf32, #tpu.memory_space<vmem>>, vector<1x128xf32>,
    return
  }
  func.func @transform_0(%arg0: i32, %arg1: memref<4xf32, #tpu.memory_space<smem>>) -> (i32, i32) {
    %c0_i32 = arith.constant 0 : i32
    %c0_i32_0 = arith.constant 0 : i32
    return %arg0, %c0_i32 : i32, i32
  }
  func.func @transform_1(%arg0: i32, %arg1: memref<4xf32, #tpu.memory_space<smem>>) -> (i32, i32) {
    %c0_i32 = arith.constant 0 : i32
    %c0_i32_0 = arith.constant 0 : i32
    return %arg0, %c0_i32 : i32, i32
  }
}

</mosaic_0001>

<llo_original>
// kernel: tpu_custom_call.1
$region0: #{tpu_custom_call.1}
  #allocation0 [shape = 'u32[]', space=smem, size = 0x4, offset = 0x4, fixed_abs, tag = 'smem constant byte address 0x4 - core index']
  #allocation1 [shape = 'u32[72,128]{1,0:T(1,128)}', space=vmem, size = 0x9000, scoped, tag = 'internal scratch']
  #allocation2 [shape = 's32[1]{0}', space=sflag, size = 0x4, scoped, tag = 'scoped memory for tpu_custom_call.1']
  #allocation3 [shape = 'u8[512]{0}', space=smem, size = 0x200, scoped, tag = 'prefetched SMEM operand 0']
  %s0 = inlined_call_operand.hbm [shape: f32[4], index: 0, kind: input, shape index: {}]
  %s1 = inlined_call_operand.hbm [shape: f32[1,128], index: 1, kind: input, shape index: {}]
  %s2 = inlined_call_operand.hbm [shape: f32[1,128], index: 2, kind: output, shape index: {}]
  %s3 = sld [smem:[#allocation0]]
  $region18: #{tpu_custom_call.1} parent=0
    _
  %s5 = ssub.s32 1, %s3
  %s6 = scalar_select 0, %s5, %s3
  %s8 = sshll.u32 %s0, 4
  %s9 = int_to_ptr.hbm [resolvable:$true] %s8
  %11 = dma.hbm_to_smem %s9, 16, [#allocation3], [#allocation2]
  %13 = dma.done [#allocation2], 16
  %14 = sfence
  $region1: #{tpu_custom_call.1} parent=0
    #allocation4 [shape = 'u8[512]{0}', space=vmem, size = 0x400, scoped, tag = 'input window, operand 1, single buffered']
    #allocation5 [shape = 's32[1]{0}', space=sflag, size = 0x4, scoped, tag = 'scoped memory for tpu_custom_call.1']
    #allocation6 [shape = 's32[1]{0}', space=sflag, size = 0x4, scoped, tag = 'scoped memory for tpu_custom_call.1']
    #allocation7 [shape = 'u8[512]{0}', space=vmem, size = 0x400, scoped, tag = 'output window, operand 0, single buffered']
    %15 = vsyncpa [#allocation5], 0
    %16 = vsyncpa [#allocation6], 0
    // Predicated region
    $region2: #{tpu_custom_call.1} parent=1 // pred_check
      _
    $region3: #{tpu_custom_call.1} parent=1 // pred_check_branch
      %18 = sbr.rel (0) target = $region5
    $region4: #{tpu_custom_call.1} parent=1 // pred_region
      %20 = vsyncadd [#allocation5], 0
      %s22 = sshll.u32 %s1, 4
      %s23 = int_to_ptr.hbm [resolvable:$true] %s22
      %s24 = sshll.u32 [#allocation4], 4
      %s25 = int_to_ptr.vmem [resolvable:$true] %s24
      %27 = dma.hbm_to_vmem [thread:$0]  %s23, 16, %s25, [#allocation5]
    $region5: #{tpu_custom_call.1} parent=1 // pred_fallthru
      _
    // Predicated region
    $region6: #{tpu_custom_call.1} parent=1 // pred_check
      _
    $region7: #{tpu_custom_call.1} parent=1 // pred_check_branch
      %29 = sbr.rel (0) target = $region9
    $region8: #{tpu_custom_call.1} parent=1 // pred_region
      %31 = dma.done [#allocation5], 16
    $region9: #{tpu_custom_call.1} parent=1 // pred_fallthru
      _
    %s32 = sld [smem:[#allocation3]]
    %s33 = sld [smem:[#allocation3 + $0x1]]
    %s34 = sld [smem:[#allocation3 + $0x2]]
    %s35 = sld [smem:[#allocation3 + $0x3]]
    %v36 = vld [vmem:[#allocation4] sm:$0x1]
    %v37 = vstv %s32
    %v38 = vmul.f32 %v36, %v37
    %v39 = vstv %s33
    %v40 = vadd.f32 %v38, %v39
    %v41 = vmul.f32 %v40, 1.442695
    %v42 = vpow.pop %v41
    %v43 = vadd.f32 %v42, 1.0
    %v44 = vrcp.pop %v43
    %v45 = vstv %s34
    %v46 = vmul.f32 %v36, %v45
    %v47 = vstv %s35
    %v48 = vadd.f32 %v46, %v47
    %v49 = vadd.f32 %v44, %v48
    %50 = vst [vmem:[#allocation7] sm:$0x1] %v49
    // Predicated region
    $region10: #{tpu_custom_call.1} parent=1 // pred_check
      _
    $region11: #{tpu_custom_call.1} parent=1 // pred_check_branch
      %52 = sbr.rel (0) target = $region13
    $region12: #{tpu_custom_call.1} parent=1 // pred_region
      %54 = vsyncadd [#allocation6], 0
      %s56 = sshll.u32 [#allocation7], 4
      %s57 = int_to_ptr.vmem [resolvable:$true] %s56
      %s58 = sshll.u32 %s2, 4
      %s59 = int_to_ptr.hbm [resolvable:$true] %s58
      %61 = dma.vmem_to_hbm [thread:$0]  %s57, 16, %s59, [#allocation6]
    $region13: #{tpu_custom_call.1} parent=1 // pred_fallthru
      _
    // Predicated region
    $region14: #{tpu_custom_call.1} parent=1 // pred_check
      _
    $region15: #{tpu_custom_call.1} parent=1 // pred_check_branch
      %63 = sbr.rel (0) target = $region17
    $region16: #{tpu_custom_call.1} parent=1 // pred_region
      %65 = dma.done [#allocation6], 16
    $region17: #{tpu_custom_call.1} parent=1 // pred_fallthru
      _
    %66 = vsyncpa [#allocation5], 1
    %67 = vsyncpa [#allocation6], 1

</llo_original>
